<compile_context>
chip_gen: v6e
topology: v6e:2x2x1
jax: 0.10.0
libtpu: 0.0.40
codegen_flags: <defaults>
</compile_context>

<pallas_src>
import functools

import jax
import jax.numpy as jnp
from jax.experimental import pallas as pl
from jax.experimental.pallas import tpu as pltpu

LANES = 128
SUBLANES = 8


def _round_up(x, k):
    return ((x + k - 1) // k) * k


def _num_tensorcores():
    """2 for multi-TensorCore chips (v4/v5p megacore, v7x), else 1 (v5e, v6e, unknown)."""
    try:
        kind = jax.devices()[0].device_kind.lower()
    except Exception:
        return 1
    for tag in ("v7", "v5p", "v4"):
        if tag in kind:
            return 2
    return 1


def _combined_loss_kernel(p_ref, t_ref, out_ref, *, tm, tiles_per_core, m_rows):
    """One (tm, 128) tile per inner grid step.

    p_ref, t_ref : (tm, 128) VMEM tiles of prediction / target (native dtype)
    out_ref      : (3, 8, 128) per-core partial-sum block, accumulated across the inner axis
                   [0]=sum(d^2), [1]=sum(|d|), [2]=sum(relu(|d|-1)^2)
    """
    c = pl.program_id(0)
    i = pl.program_id(1)

    @pl.when(i == 0)
    def _init():
        out_ref[...] = jnp.zeros_like(out_ref)

    def _accumulate(d):
        ad = jnp.abs(d)
        sq = d * d
        e = jnp.maximum(ad - 1.0, 0.0)          # relu(|d| - 1)
        r2 = e * e
        # VALU tree-reduce each (tm,128) quantity into a single (8,128) vreg, then one
        # read-modify-write of the tiny resident output block (keeps the vst slot idle).
        out_ref[0, :, :] += jnp.sum(sq.reshape(-1, SUBLANES, LANES), axis=0)
        out_ref[1, :, :] += jnp.sum(ad.reshape(-1, SUBLANES, LANES), axis=0)
        out_ref[2, :, :] += jnp.sum(r2.reshape(-1, SUBLANES, LANES), axis=0)

    # Logical (unclamped) first row of this step; rows >= m_rows are out-of-bounds garbage.
    base = (c * tiles_per_core + i) * tm
    tile_is_full = base + tm <= m_rows

    @pl.when(tile_is_full)
    def _full():
        _accumulate(p_ref[...].astype(jnp.float32) - t_ref[...].astype(jnp.float32))

    @pl.when(jnp.logical_not(tile_is_full))
    def _ragged():
        rows = jax.lax.broadcasted_iota(jnp.int32, (tm, LANES), 0) + base
        valid = rows < m_rows
        d = p_ref[...].astype(jnp.float32) - t_ref[...].astype(jnp.float32)
        _accumulate(jnp.where(valid, d, 0.0))   # mask d BEFORE |d|, d^2, huber terms


@functools.partial(
    jax.jit, static_argnames=("secondary_weight", "tertiary_weight", "max_tile_rows")
)
def combined_loss(pred, target, *, secondary_weight=0.5, tertiary_weight=0.3,
                  max_tile_rows=None):
    """Pallas-fused CombinedLoss forward. Returns a dict of scalar components."""
    assert pred.shape == target.shape, "pred/target shape mismatch"
    n = pred.size
    assert n > 0, "empty input"

    itemsize = max(jnp.dtype(pred.dtype).itemsize, jnp.dtype(target.dtype).itemsize)
    if max_tile_rows is None:
        # ~16 MiB of double-buffered inputs at these sizes; fits the 32 MiB scoped limit below.
        max_tile_rows = 16384 if itemsize <= 2 else 8192
    max_tile_rows = max(SUBLANES, _round_up(int(max_tile_rows), SUBLANES))

    n_pad = _round_up(n, LANES)
    m_rows = n_pad // LANES                      # actual rows of the 2-D input slab

    ncores = _num_tensorcores()
    if m_rows < 64:                              # don't split tiny inputs across cores
        ncores = 1

    rows_per_core = -(-m_rows // ncores)
    tm = min(max_tile_rows, _round_up(rows_per_core, SUBLANES))
    tiles_per_core = -(-rows_per_core // tm)
    nblocks = -(-m_rows // tm)                   # blocks that actually overlap the array

    def _prep(x):
        flat = x.reshape(-1)
        if n_pad != n:
            # TODO(synk): <128-element pad still costs one extra HBM pass when numel % 128 != 0;
            # fully pad-free ragged handling would need 1-D blocks / manual DMA.
            flat = jnp.pad(flat, (0, n_pad - n))
        return flat.reshape(m_rows, LANES)       # zero-copy bitcast reshape when n % 128 == 0

    p2d, t2d = _prep(pred), _prep(target)

    # Clamp redundant trailing blocks (rounding of tiles across cores) to an in-bounds block;
    # their contribution is zeroed in-kernel via the row mask (unclamped base >= m_rows).
    in_map = lambda c, i: (jnp.minimum(c * tiles_per_core + i, nblocks - 1), 0)

    kernel = functools.partial(_combined_loss_kernel, tm=tm,
                               tiles_per_core=tiles_per_core, m_rows=m_rows)

    out_bytes = ncores * 3 * SUBLANES * LANES * 4
    cost = pl.CostEstimate(
        flops=9 * n,
        transcendentals=0,
        bytes_accessed=n * (jnp.dtype(pred.dtype).itemsize
                            + jnp.dtype(target.dtype).itemsize) + out_bytes,
    )

    partials = pl.pallas_call(
        kernel,
        out_shape=jax.ShapeDtypeStruct((ncores, 3, SUBLANES, LANES), jnp.float32),
        grid_spec=pltpu.PrefetchScalarGridSpec(
            num_scalar_prefetch=0,
            grid=(ncores, tiles_per_core),
            in_specs=[
                pl.BlockSpec((tm, LANES), in_map),
                pl.BlockSpec((tm, LANES), in_map),
            ],
            out_specs=pl.BlockSpec((None, 3, SUBLANES, LANES), lambda c, i: (c, 0, 0, 0)),
        ),
        compiler_params=pltpu.CompilerParams(
            dimension_semantics=("parallel", "arbitrary"),
            vmem_limit_bytes=32 * 1024 * 1024,
        ),
        cost_estimate=cost,
    )(p2d, t2d)

    # (ncores, 3, 8, 128) -> three scalar sums (tiny reduction, done in the wrapper).
    sums = jnp.sum(partials, axis=(0, 2, 3))
    inv_n = jnp.float32(1.0 / n)
    primary = sums[0] * inv_n                              # MSE (mean)
    secondary = sums[1] * inv_n                            # L1  (mean)
    tertiary = 0.5 * (sums[0] - sums[2]) * inv_n           # SmoothL1 = 0.5*(d^2 - relu(|d|-1)^2)

    combined = primary + secondary_weight * secondary + tertiary_weight * tertiary

    # Mirrors the dict structure of CombinedLoss.forward
    return {
        "loss": combined,
        "primary_loss": primary,
        "secondary_loss": secondary,
        "secondary_weight": jnp.float32(secondary_weight),
        "tertiary_loss": tertiary,
        "tertiary_weight": jnp.float32(tertiary_weight),
    }


def _reference(pred, target, sw=0.5, tw=0.3):
    d = pred.astype(jnp.float32) - target.astype(jnp.float32)
    ad = jnp.abs(d)
    mse = jnp.mean(d * d)
    l1 = jnp.mean(ad)
    hub = jnp.mean(jnp.where(ad < 1.0, 0.5 * d * d, ad - 0.5))
    return mse + sw * l1 + tw * hub


# TODO(synk): the generic CombinedLoss wrapper accepts arbitrary nn.Module losses and forwards
# extra dict keys / uses .item(); only the concrete MSE+L1+SmoothL1 instantiation is fused here.

if __name__ == "__main__":
    key = jax.random.PRNGKey(0)
    k1, k2, k3, k4, k5, k6, k7, k8 = jax.random.split(key, 8)

    # 1) NCHW f32, 128-aligned element count (zero-copy path, single full tile).
    pred = jax.random.normal(k1, (2, 4, 16, 16), dtype=jnp.float32)
    target = jax.random.normal(k2, (2, 4, 16, 16), dtype=jnp.float32)
    out = combined_loss(pred, target)
    jax.block_until_ready(out["loss"])
    assert jnp.allclose(out["loss"], _reference(pred, target), rtol=1e-5, atol=1e-5)
    assert jnp.allclose(out["primary_loss"], jnp.mean((pred - target) ** 2),
                        rtol=1e-5, atol=1e-5)

    # 2) bf16 + non-128-multiple shape: native-dtype streaming + in-kernel ragged-row masking.
    pred_b = jax.random.normal(k3, (2, 3, 15, 17), dtype=jnp.bfloat16)
    target_b = jax.random.normal(k4, (2, 3, 15, 17), dtype=jnp.bfloat16)
    out_b = combined_loss(pred_b, target_b)
    jax.block_until_ready(out_b["loss"])
    assert jnp.allclose(out_b["loss"], _reference(pred_b, target_b), rtol=1e-3, atol=1e-3)

    # 3) Force a small tile so the multi-tile accumulation + last-tile mask path is exercised.
    pred_c = jax.random.normal(k5, (1, 3, 50, 50), dtype=jnp.float32)
    target_c = jax.random.normal(k6, (1, 3, 50, 50), dtype=jnp.float32)
    out_c = combined_loss(pred_c, target_c, max_tile_rows=16)
    jax.block_until_ready(out_c["loss"])
    assert jnp.allclose(out_c["loss"], _reference(pred_c, target_c), rtol=1e-5, atol=1e-5)

    # 4) Aligned multi-tile case (exercises core split on multi-TC chips, plain loop elsewhere).
    pred_d = jax.random.normal(k7, (4, 4, 32, 32), dtype=jnp.float32)
    target_d = jax.random.normal(k8, (4, 4, 32, 32), dtype=jnp.float32)
    out_d = combined_loss(pred_d, target_d, max_tile_rows=32)
    jax.block_until_ready(out_d["loss"])
    assert jnp.allclose(out_d["loss"], _reference(pred_d, target_d), rtol=1e-5, atol=1e-5)

    print("KERNEL_OK")
</pallas_src>

<mosaic_0001>
module attributes {stable_mosaic.version = 11 : i64} {
  func.func @_combined_loss_kernel(%arg0: i32, %arg1: i32, %arg2: memref<16x128xf32, #tpu.memory_space<vmem>>, %arg3: memref<16x128xf32, #tpu.memory_space<vmem>>, %arg4: memref<1x3x8x128xf32, #tpu.memory_space<vmem>>) attributes {dimension_semantics = [#tpu.dimension_semantics<parallel>, #tpu.dimension_semantics<arbitrary>], iteration_bounds = array<i64: 1, 1>, scalar_prefetch = 0 : i64, scratch_operands = 0 : i64, tpu.core_type = #tpu.core_type<tc>, window_params = [{transform_indices = @transform_0, window_bounds = array<i64: 16, 128>}, {transform_indices = @transform_1, window_bounds = array<i64: 16, 128>}, {transform_indices = @transform_2, window_bounds = array<i64: 1, 3, 8, 128>}]} {
    %c0_i32 = arith.constant 0 : i32
    %0 = arith.cmpi eq, %arg1, %c0_i32 : i32
    %1 = arith.extui %0 : i1 to i32
    %c0_i32_0 = arith.constant 0 : i32
    %2 = arith.cmpi ne, %1, %c0_i32_0 : i32
    scf.if %2 {
      %cst = arith.constant 0.000000e+00 : f32
      %13 = vector.broadcast %cst : f32 to vector<3x8x128xf32>
      %c0 = arith.constant 0 : index
      %c0_5 = arith.constant 0 : index
      %c0_6 = arith.constant 0 : index
      %c0_7 = arith.constant 0 : index
      %14 = vector.load %arg4[%c0, %c0_5, %c0_6, %c0_7] : memref<1x3x8x128xf32, #tpu.memory_space<vmem>>, vector<1x3x8x128xf32>
      %15 = vector.shape_cast %14 : vector<1x3x8x128xf32> to vector<3x8x128xf32>
      %16 = vector.shape_cast %13 : vector<3x8x128xf32> to vector<1x3x8x128xf32>
      tpu.vector_store %arg4[%c0, %c0_5, %c0_6, %c0_7], %16 {strides = array<i32>} : memref<1x3x8x128xf32, #tpu.memory_space<vmem>>, vector<1x3x8x128xf32>,
    } else {
    }
    %c1_i32 = arith.constant 1 : i32
    %3 = arith.muli %arg0, %c1_i32 : i32
    %4 = arith.addi %3, %arg1 : i32
    %c16_i32 = arith.constant 16 : i32
    %5 = arith.muli %4, %c16_i32 : i32
    %c16_i32_1 = arith.constant 16 : i32
    %6 = arith.addi %5, %c16_i32_1 : i32
    %c16_i32_2 = arith.constant 16 : i32
    %7 = arith.cmpi sle, %6, %c16_i32_2 : i32
    %8 = arith.extui %7 : i1 to i32
    %c0_i32_3 = arith.constant 0 : i32
    %9 = arith.cmpi ne, %8, %c0_i32_3 : i32
    scf.if %9 {
      %c0 = arith.constant 0 : index
      %c0_5 = arith.constant 0 : index
      %13 = vector.load %arg2[%c0, %c0_5] : memref<16x128xf32, #tpu.memory_space<vmem>>, vector<16x128xf32>
      %c0_6 = arith.constant 0 : index
      %c0_7 = arith.constant 0 : index
      %14 = vector.load %arg3[%c0_6, %c0_7] : memref<16x128xf32, #tpu.memory_space<vmem>>, vector<16x128xf32>
      %15 = arith.subf %13, %14 : vector<16x128xf32>
      %16 = math.absf %15 : vector<16x128xf32>
      %17 = arith.mulf %15, %15 : vector<16x128xf32>
      %cst = arith.constant 1.000000e+00 : f32
      %18 = vector.broadcast %cst : f32 to vector<16x128xf32>
      %19 = arith.subf %16, %18 : vector<16x128xf32>
      %cst_8 = arith.constant 0.000000e+00 : f32
      %20 = vector.broadcast %cst_8 : f32 to vector<16x128xf32>
      %21 = arith.maximumf %19, %20 : vector<16x128xf32>
      %22 = arith.mulf %21, %21 : vector<16x128xf32>
      %c0_9 = arith.constant 0 : index
      %c0_10 = arith.constant 0 : index
      %c0_11 = arith.constant 0 : index
      %c0_12 = arith.constant 0 : index
      %23 = vector.load %arg4[%c0_9, %c0_10, %c0_11, %c0_12] : memref<1x3x8x128xf32, #tpu.memory_space<vmem>>, vector<1x1x8x128xf32>
      %24 = vector.shape_cast %23 : vector<1x1x8x128xf32> to vector<8x128xf32>
      %25 = vector.shape_cast %17 : vector<16x128xf32> to vector<2x8x128xf32>
      %cst_13 = arith.constant dense<0.000000e+00> : vector<8x128xf32>
      %26 = vector.multi_reduction <add>, %25, %cst_13 [0] : vector<2x8x128xf32> to vector<8x128xf32>
      %27 = arith.addf %24, %26 : vector<8x128xf32>
      %c0_14 = arith.constant 0 : index
      %c0_15 = arith.constant 0 : index
      %c0_16 = arith.constant 0 : index
      %c0_17 = arith.constant 0 : index
      %28 = vector.load %arg4[%c0_14, %c0_15, %c0_16, %c0_17] : memref<1x3x8x128xf32, #tpu.memory_space<vmem>>, vector<1x1x8x128xf32>
      %29 = vector.shape_cast %28 : vector<1x1x8x128xf32> to vector<8x128xf32>
      %30 = vector.shape_cast %27 : vector<8x128xf32> to vector<1x1x8x128xf32>
      tpu.vector_store %arg4[%c0_14, %c0_15, %c0_16, %c0_17], %30 {strides = array<i32>} : memref<1x3x8x128xf32, #tpu.memory_space<vmem>>, vector<1x1x8x128xf32>,
      %c0_18 = arith.constant 0 : index
      %c1 = arith.constant 1 : index
      %c0_19 = arith.constant 0 : index
      %c0_20 = arith.constant 0 : index
      %31 = vector.load %arg4[%c0_18, %c1, %c0_19, %c0_20] : memref<1x3x8x128xf32, #tpu.memory_space<vmem>>, vector<1x1x8x128xf32>
      %32 = vector.shape_cast %31 : vector<1x1x8x128xf32> to vector<8x128xf32>
      %33 = vector.shape_cast %16 : vector<16x128xf32> to vector<2x8x128xf32>
      %cst_21 = arith.constant dense<0.000000e+00> : vector<8x128xf32>
      %34 = vector.multi_reduction <add>, %33, %cst_21 [0] : vector<2x8x128xf32> to vector<8x128xf32>
      %35 = arith.addf %32, %34 : vector<8x128xf32>
      %c0_22 = arith.constant 0 : index
      %c1_23 = arith.constant 1 : index
      %c0_24 = arith.constant 0 : index
      %c0_25 = arith.constant 0 : index
      %36 = vector.load %arg4[%c0_22, %c1_23, %c0_24, %c0_25] : memref<1x3x8x128xf32, #tpu.memory_space<vmem>>, vector<1x1x8x128xf32>
      %37 = vector.shape_cast %36 : vector<1x1x8x128xf32> to vector<8x128xf32>
      %38 = vector.shape_cast %35 : vector<8x128xf32> to vector<1x1x8x128xf32>
      tpu.vector_store %arg4[%c0_22, %c1_23, %c0_24, %c0_25], %38 {strides = array<i32>} : memref<1x3x8x128xf32, #tpu.memory_space<vmem>>, vector<1x1x8x128xf32>,
      %c0_26 = arith.constant 0 : index
      %c2 = arith.constant 2 : index
      %c0_27 = arith.constant 0 : index
      %c0_28 = arith.constant 0 : index
      %39 = vector.load %arg4[%c0_26, %c2, %c0_27, %c0_28] : memref<1x3x8x128xf32, #tpu.memory_space<vmem>>, vector<1x1x8x128xf32>
      %40 = vector.shape_cast %39 : vector<1x1x8x128xf32> to vector<8x128xf32>
      %41 = vector.shape_cast %22 : vector<16x128xf32> to vector<2x8x128xf32>
      %cst_29 = arith.constant dense<0.000000e+00> : vector<8x128xf32>
      %42 = vector.multi_reduction <add>, %41, %cst_29 [0] : vector<2x8x128xf32> to vector<8x128xf32>
      %43 = arith.addf %40, %42 : vector<8x128xf32>
      %c0_30 = arith.constant 0 : index
      %c2_31 = arith.constant 2 : index
      %c0_32 = arith.constant 0 : index
      %c0_33 = arith.constant 0 : index
      %44 = vector.load %arg4[%c0_30, %c2_31, %c0_32, %c0_33] : memref<1x3x8x128xf32, #tpu.memory_space<vmem>>, vector<1x1x8x128xf32>
      %45 = vector.shape_cast %44 : vector<1x1x8x128xf32> to vector<8x128xf32>
      %46 = vector.shape_cast %43 : vector<8x128xf32> to vector<1x1x8x128xf32>
      tpu.vector_store %arg4[%c0_30, %c2_31, %c0_32, %c0_33], %46 {strides = array<i32>} : memref<1x3x8x128xf32, #tpu.memory_space<vmem>>, vector<1x1x8x128xf32>,
    } else {
    }
    %true = arith.constant true
    %10 = arith.xori %7, %true : i1
    %11 = arith.extui %10 : i1 to i32
    %c0_i32_4 = arith.constant 0 : i32
    %12 = arith.cmpi ne, %11, %c0_i32_4 : i32
    scf.if %12 {
      %13 = tpu.iota {dimensions = array<i32: 0>} : vector<16x128xi32>
      %14 = vector.broadcast %5 : i32 to vector<16x128xi32>
      %15 = arith.addi %13, %14 : vector<16x128xi32>
      %c16_i32_5 = arith.constant 16 : i32
      %16 = vector.broadcast %c16_i32_5 : i32 to vector<16x128xi32>
      %17 = arith.cmpi slt, %15, %16 : vector<16x128xi32>
      %c0 = arith.constant 0 : index
      %c0_6 = arith.constant 0 : index
      %18 = vector.load %arg2[%c0, %c0_6] : memref<16x128xf32, #tpu.memory_space<vmem>>, vector<16x128xf32>
      %c0_7 = arith.constant 0 : index
      %c0_8 = arith.constant 0 : index
      %19 = vector.load %arg3[%c0_7, %c0_8] : memref<16x128xf32, #tpu.memory_space<vmem>>, vector<16x128xf32>
      %20 = arith.subf %18, %19 : vector<16x128xf32>
      %cst = arith.constant 0.000000e+00 : f32
      %21 = vector.broadcast %cst : f32 to vector<16x128xf32>
      %22 = arith.select %17, %20, %21 : vector<16x128xi1>, vector<16x128xf32>
      %23 = math.absf %22 : vector<16x128xf32>
      %24 = arith.mulf %22, %22 : vector<16x128xf32>
      %cst_9 = arith.constant 1.000000e+00 : f32
      %25 = vector.broadcast %cst_9 : f32 to vector<16x128xf32>
      %26 = arith.subf %23, %25 : vector<16x128xf32>
      %cst_10 = arith.constant 0.000000e+00 : f32
      %27 = vector.broadcast %cst_10 : f32 to vector<16x128xf32>
      %28 = arith.maximumf %26, %27 : vector<16x128xf32>
      %29 = arith.mulf %28, %28 : vector<16x128xf32>
      %c0_11 = arith.constant 0 : index
      %c0_12 = arith.constant 0 : index
      %c0_13 = arith.constant 0 : index
      %c0_14 = arith.constant 0 : index
      %30 = vector.load %arg4[%c0_11, %c0_12, %c0_13, %c0_14] : memref<1x3x8x128xf32, #tpu.memory_space<vmem>>, vector<1x1x8x128xf32>
      %31 = vector.shape_cast %30 : vector<1x1x8x128xf32> to vector<8x128xf32>
      %32 = vector.shape_cast %24 : vector<16x128xf32> to vector<2x8x128xf32>
      %cst_15 = arith.constant dense<0.000000e+00> : vector<8x128xf32>
      %33 = vector.multi_reduction <add>, %32, %cst_15 [0] : vector<2x8x128xf32> to vector<8x128xf32>
      %34 = arith.addf %31, %33 : vector<8x128xf32>
      %c0_16 = arith.constant 0 : index
      %c0_17 = arith.constant 0 : index
      %c0_18 = arith.constant 0 : index
      %c0_19 = arith.constant 0 : index
      %35 = vector.load %arg4[%c0_16, %c0_17, %c0_18, %c0_19] : memref<1x3x8x128xf32, #tpu.memory_space<vmem>>, vector<1x1x8x128xf32>
      %36 = vector.shape_cast %35 : vector<1x1x8x128xf32> to vector<8x128xf32>
      %37 = vector.shape_cast %34 : vector<8x128xf32> to vector<1x1x8x128xf32>
      tpu.vector_store %arg4[%c0_16, %c0_17, %c0_18, %c0_19], %37 {strides = array<i32>} : memref<1x3x8x128xf32, #tpu.memory_space<vmem>>, vector<1x1x8x128xf32>,
      %c0_20 = arith.constant 0 : index
      %c1 = arith.constant 1 : index
      %c0_21 = arith.constant 0 : index
      %c0_22 = arith.constant 0 : index
      %38 = vector.load %arg4[%c0_20, %c1, %c0_21, %c0_22] : memref<1x3x8x128xf32, #tpu.memory_space<vmem>>, vector<1x1x8x128xf32>
      %39 = vector.shape_cast %38 : vector<1x1x8x128xf32> to vector<8x128xf32>
      %40 = vector.shape_cast %23 : vector<16x128xf32> to vector<2x8x128xf32>
      %cst_23 = arith.constant dense<0.000000e+00> : vector<8x128xf32>
      %41 = vector.multi_reduction <add>, %40, %cst_23 [0] : vector<2x8x128xf32> to vector<8x128xf32>
      %42 = arith.addf %39, %41 : vector<8x128xf32>
      %c0_24 = arith.constant 0 : index
      %c1_25 = arith.constant 1 : index
      %c0_26 = arith.constant 0 : index
      %c0_27 = arith.constant 0 : index
      %43 = vector.load %arg4[%c0_24, %c1_25, %c0_26, %c0_27] : memref<1x3x8x128xf32, #tpu.memory_space<vmem>>, vector<1x1x8x128xf32>
      %44 = vector.shape_cast %43 : vector<1x1x8x128xf32> to vector<8x128xf32>
      %45 = vector.shape_cast %42 : vector<8x128xf32> to vector<1x1x8x128xf32>
      tpu.vector_store %arg4[%c0_24, %c1_25, %c0_26, %c0_27], %45 {strides = array<i32>} : memref<1x3x8x128xf32, #tpu.memory_space<vmem>>, vector<1x1x8x128xf32>,
      %c0_28 = arith.constant 0 : index
      %c2 = arith.constant 2 : index
      %c0_29 = arith.constant 0 : index
      %c0_30 = arith.constant 0 : index
      %46 = vector.load %arg4[%c0_28, %c2, %c0_29, %c0_30] : memref<1x3x8x128xf32, #tpu.memory_space<vmem>>, vector<1x1x8x128xf32>
      %47 = vector.shape_cast %46 : vector<1x1x8x128xf32> to vector<8x128xf32>
      %48 = vector.shape_cast %29 : vector<16x128xf32> to vector<2x8x128xf32>
      %cst_31 = arith.constant dense<0.000000e+00> : vector<8x128xf32>
      %49 = vector.multi_reduction <add>, %48, %cst_31 [0] : vector<2x8x128xf32> to vector<8x128xf32>
      %50 = arith.addf %47, %49 : vector<8x128xf32>
      %c0_32 = arith.constant 0 : index
      %c2_33 = arith.constant 2 : index
      %c0_34 = arith.constant 0 : index
      %c0_35 = arith.constant 0 : index
      %51 = vector.load %arg4[%c0_32, %c2_33, %c0_34, %c0_35] : memref<1x3x8x128xf32, #tpu.memory_space<vmem>>, vector<1x1x8x128xf32>
      %52 = vector.shape_cast %51 : vector<1x1x8x128xf32> to vector<8x128xf32>
      %53 = vector.shape_cast %50 : vector<8x128xf32> to vector<1x1x8x128xf32>
      tpu.vector_store %arg4[%c0_32, %c2_33, %c0_34, %c0_35], %53 {strides = array<i32>} : memref<1x3x8x128xf32, #tpu.memory_space<vmem>>, vector<1x1x8x128xf32>,
    } else {
    }
    return
  }
  func.func @transform_0(%arg0: i32, %arg1: i32) -> (i32, i32) {
    %c1_i32 = arith.constant 1 : i32
    %0 = arith.muli %arg0, %c1_i32 : i32
    %1 = arith.addi %0, %arg1 : i32
    %c0_i32 = arith.constant 0 : i32
    %2 = arith.minsi %1, %c0_i32 : i32
    %c0_i32_0 = arith.constant 0 : i32
    %c0_i32_1 = arith.constant 0 : i32
    return %2, %c0_i32_0 : i32, i32
  }
  func.func @transform_1(%arg0: i32, %arg1: i32) -> (i32, i32) {
    %c1_i32 = arith.constant 1 : i32
    %0 = arith.muli %arg0, %c1_i32 : i32
    %1 = arith.addi %0, %arg1 : i32
    %c0_i32 = arith.constant 0 : i32
    %2 = arith.minsi %1, %c0_i32 : i32
    %c0_i32_0 = arith.constant 0 : i32
    %c0_i32_1 = arith.constant 0 : i32
    return %2, %c0_i32_0 : i32, i32
  }
  func.func @transform_2(%arg0: i32, %arg1: i32) -> (i32, i32, i32, i32) {
    %c0_i32 = arith.constant 0 : i32
    %c0_i32_0 = arith.constant 0 : i32
    %c0_i32_1 = arith.constant 0 : i32
    %c0_i32_2 = arith.constant 0 : i32
    return %arg0, %c0_i32, %c0_i32_0, %c0_i32_1 : i32, i32, i32, i32
  }
}

</mosaic_0001>

<llo_original>
// kernel: combined_loss.1
$region0: #{combined_loss.1}
  #allocation0 [shape = 'u32[]', space=smem, size = 0x4, offset = 0x4, fixed_abs, tag = 'smem constant byte address 0x4 - core index']
  #allocation1 [shape = 'u32[144,128]{1,0:T(1,128)}', space=vmem, size = 0x12000, scoped, tag = 'internal scratch']
  %s0 = inlined_call_operand.vmem [shape: f32[16,128], index: 0, kind: input, shape index: {}]
  %s1 = inlined_call_operand.vmem [shape: f32[16,128], index: 1, kind: input, shape index: {}]
  %s2 = inlined_call_operand.vmem [shape: f32[1,3,8,128], index: 2, kind: output, shape index: {}]
  %s3 = sld [smem:[#allocation0]]
  $region30: #{combined_loss.1} parent=0
    _
  %s5 = ssub.s32 1, %s3
  %s6 = scalar_select 0, %s5, %s3
  // Predicated region
  $region2: #{combined_loss.1} parent=0 // pred_check
    _
  $region3: #{combined_loss.1} parent=0 // pred_check_branch
    %8 = sbr.rel (0) target = $region5
  $region4: #{combined_loss.1} parent=0 // pred_region
    %s9 = sadd.s32 0, 0
    %p10 = scmp.lt.s32.totalorder %s9, 0
    %s11 = scalar_select %p10, %s9, 0
    %s12 = smul.u32 2, %s11
    %p13 = scmp.lt.s32.totalorder %s12, 1
    %s14 = scalar_select %p13, %s12, 1
    %s15 = smul.addr %s14, 8
    %s16 = scalar_lea.vmem %s0, %s15
    %s17 = sadd.s32 0, 0
    %p18 = scmp.lt.s32.totalorder %s17, 0
    %s19 = scalar_select %p18, %s17, 0
    %s20 = smul.u32 2, %s19
  $region5: #{combined_loss.1} parent=0 // pred_fallthru
    _
  // Predicated region
  $region6: #{combined_loss.1} parent=0 // pred_check
    _
  $region7: #{combined_loss.1} parent=0 // pred_check_branch
    %22 = sbr.rel (0) target = $region9
  $region8: #{combined_loss.1} parent=0 // pred_region
    %s23 = sadd.s32 0, 0
    %p24 = scmp.lt.s32.totalorder %s23, 0
    %s25 = scalar_select %p24, %s23, 0
    %s26 = smul.u32 2, %s25
    %p27 = scmp.lt.s32.totalorder %s26, 1
    %s28 = scalar_select %p27, %s26, 1
    %s29 = smul.addr %s28, 8
    %s30 = scalar_lea.vmem %s1, %s29
    %s31 = sadd.s32 0, 0
    %p32 = scmp.lt.s32.totalorder %s31, 0
    %s33 = scalar_select %p32, %s31, 0
    %s34 = smul.u32 2, %s33
  $region9: #{combined_loss.1} parent=0 // pred_fallthru
    _
  %s35 = sadd.s32 0, 0
  %p36 = scmp.lt.s32.totalorder %s35, 0
  %s37 = scalar_select %p36, %s35, 0
  %s38 = smul.u32 2, %s37
  %p39 = scmp.lt.s32.totalorder %s38, 1
  %s40 = scalar_select %p39, %s38, 1
  %s41 = smul.addr %s40, 8
  %s42 = scalar_lea.vmem %s0, %s41
  %s43 = sadd.s32 0, 0
  %p44 = scmp.lt.s32.totalorder %s43, 0
  %s45 = scalar_select %p44, %s43, 0
  %s46 = smul.u32 2, %s45
  %p47 = scmp.lt.s32.totalorder %s46, 1
  %s48 = scalar_select %p47, %s46, 1
  %s49 = smul.addr %s48, 8
  %s50 = scalar_lea.vmem %s1, %s49
  %s51 = sadd.s32 0, 0
  %p52 = scmp.lt.s32.totalorder %s51, 0
  %s53 = scalar_select %p52, %s51, 0
  %s54 = smul.u32 2, %s53
  %p55 = scmp.lt.s32.totalorder %s54, 1
  %s56 = scalar_select %p55, %s54, 1
  %s57 = smul.addr %s56, 8
  %s58 = scalar_lea.vmem %s0, %s57
  %s59 = sadd.s32 0, 0
  %p60 = scmp.lt.s32.totalorder %s59, 0
  %s61 = scalar_select %p60, %s59, 0
  %s62 = smul.u32 2, %s61
  %s63 = sadd.s32 0, 0
  %p64 = scmp.lt.s32.totalorder %s63, 0
  %s65 = scalar_select %p64, %s63, 0
  %s66 = smul.u32 2, %s65
  %p67 = scmp.lt.s32.totalorder %s66, 1
  %s68 = scalar_select %p67, %s66, 1
  %s69 = smul.addr %s68, 8
  %s70 = scalar_lea.vmem %s1, %s69
  %s71 = sadd.s32 0, 0
  %p72 = scmp.lt.s32.totalorder %s71, 0
  %s73 = scalar_select %p72, %s71, 0
  %s74 = smul.u32 2, %s73
  %p75 = scmp.eq.s32.totalorder 0, 0
  // Predicated region
  $region10: #{combined_loss.1} parent=0 // pred_check
    %p76 = pneg %p75
  $region11: #{combined_loss.1} parent=0 // pred_check_branch
    %78 = sbr.rel (%p76) target = $region13
  $region12: #{combined_loss.1} parent=0 // pred_region
    %79 = vst [vmem:[%s2] sm:$0xff] 0.0
    %80 = vst [vmem:[%s2 + $0x8] sm:$0xff] 0.0
    %81 = vst [vmem:[%s2 + $0x10] sm:$0xff] 0.0
  $region13: #{combined_loss.1} parent=0 // pred_fallthru
    _
  %s82 = sadd.s32 0, 0
  %s83 = smul.u32 %s82, 16
  %s84 = sadd.s32 %s83, 16
  %p85 = scmp.le.s32.totalorder %s84, 16
  // Predicated region
  $region14: #{combined_loss.1} parent=0 // pred_check
    %p86 = pneg %p85
  $region15: #{combined_loss.1} parent=0 // pred_check_branch
    %88 = sbr.rel (%p86) target = $region17
  $region16: #{combined_loss.1} parent=0 // pred_region
    %v89 = vld [vmem:[%s58] sm:$0xff]
    %v90 = vld [vmem:[%s58 + $0x8] sm:$0xff]
    %v91 = vld [vmem:[%s70] sm:$0xff]
    %v92 = vld [vmem:[%s70 + $0x8] sm:$0xff]
    %v93 = vsub.f32 %v89, %v91
    %v94 = vsub.f32 %v90, %v92
    %v95 = vand.u32 2147483647, %v93
    %v96 = vand.u32 2147483647, %v94
    %v97 = vmul.f32 %v93, %v93
    %v98 = vmul.f32 %v94, %v94
    %v99 = vsub.f32 %v95, 1.0
    %v100 = vsub.f32 %v96, 1.0
    %v101 = vmax.f32 %v99, 0.0
    %v102 = vmax.f32 %v100, 0.0
    %v103 = vmul.f32 %v101, %v101
    %v104 = vmul.f32 %v102, %v102
    %v105 = vld [vmem:[%s2] sm:$0xff]
    %v106 = vadd.f32 %v97, %v98
    %v107 = vadd.f32 %v105, %v106
    %108 = vst [vmem:[%s2] sm:$0xff] %v107
    %s109 = scalar_lea.vmem %s2, 8
    %v110 = vld [vmem:[%s109] sm:$0xff]
    %v111 = vadd.f32 %v95, %v96
    %v112 = vadd.f32 %v110, %v111
    %113 = vst [vmem:[%s109] sm:$0xff] %v112
    %s114 = scalar_lea.vmem %s2, 16
    %v115 = vld [vmem:[%s114] sm:$0xff]
    %v116 = vadd.f32 %v103, %v104
    %v117 = vadd.f32 %v115, %v116
    %118 = vst [vmem:[%s114] sm:$0xff] %v117
  $region17: #{combined_loss.1} parent=0 // pred_fallthru
    _
  %p119 = scmp.gt.s32.totalorder %s84, 16
  // Predicated region
  $region18: #{combined_loss.1} parent=0 // pred_check
    %p120 = pneg %p119
  $region19: #{combined_loss.1} parent=0 // pred_check_branch
    %122 = sbr.rel (%p120) target = $region21
  $region20: #{combined_loss.1} parent=0 // pred_region
    %v123 = vlaneseq
    %v124 = vshrl.u32 %v123, 7
    %v125 = vadd.s32 %v124, 8
    %v126 = vstv %s83
    %v127 = vadd.s32 %v124, %v126
    %v128 = vadd.s32 %v125, %v126
    %vm129 = vcmp.lt.s32.totalorder %v127, 16
    %vm130 = vcmp.lt.s32.totalorder %v128, 16
    %v131 = vld [vmem:[%s58] sm:$0xff]
    %v132 = vld [vmem:[%s58 + $0x8] sm:$0xff]
    %v133 = vld [vmem:[%s70] sm:$0xff]
    %v134 = vld [vmem:[%s70 + $0x8] sm:$0xff]
    %v135 = vsub.f32 %v131, %v133
    %v136 = vsub.f32 %v132, %v134
    %v137 = vsel %vm129, %v135, 0.0
    %v138 = vsel %vm130, %v136, 0.0
    %v139 = vand.u32 2147483647, %v137
    %v140 = vand.u32 2147483647, %v138
    %v141 = vmul.f32 %v137, %v137
    %v142 = vmul.f32 %v138, %v138
    %v143 = vsub.f32 %v139, 1.0
    %v144 = vsub.f32 %v140, 1.0
    %v145 = vmax.f32 %v143, 0.0
    %v146 = vmax.f32 %v144, 0.0
    %v147 = vmul.f32 %v145, %v145
    %v148 = vmul.f32 %v146, %v146
    %v149 = vld [vmem:[%s2] sm:$0xff]
    %v150 = vadd.f32 %v141, %v142
    %v151 = vadd.f32 %v149, %v150
    %152 = vst [vmem:[%s2] sm:$0xff] %v151
    %s153 = scalar_lea.vmem %s2, 8
    %v154 = vld [vmem:[%s153] sm:$0xff]
    %v155 = vadd.f32 %v139, %v140
    %v156 = vadd.f32 %v154, %v155
    %157 = vst [vmem:[%s153] sm:$0xff] %v156
    %s158 = scalar_lea.vmem %s2, 16
    %v159 = vld [vmem:[%s158] sm:$0xff]
    %v160 = vadd.f32 %v147, %v148
    %v161 = vadd.f32 %v159, %v160
    %162 = vst [vmem:[%s158] sm:$0xff] %v161
  $region21: #{combined_loss.1} parent=0 // pred_fallthru
    _
  // Predicated region
  $region22: #{combined_loss.1} parent=0 // pred_check
    _
  $region23: #{combined_loss.1} parent=0 // pred_check_branch
    %164 = sbr.rel (0) target = $region25
  $region24: #{combined_loss.1} parent=0 // pred_region
    _
  $region25: #{combined_loss.1} parent=0 // pred_fallthru
    _
  // Predicated region
  $region26: #{combined_loss.1} parent=0 // pred_check
    _
  $region27: #{combined_loss.1} parent=0 // pred_check_branch
    %166 = sbr.rel (0) target = $region29
  $region28: #{combined_loss.1} parent=0 // pred_region
    _
  $region29: #{combined_loss.1} parent=0 // pred_fallthru
    _

</llo_original>
